<compile_context>
chip_gen: v5e
topology: v5e:2x2
jax: 0.10.0
libtpu: 0.0.40
codegen_flags: <defaults>
</compile_context>

<pallas_src>
import functools

import jax
import jax.numpy as jnp
from jax.experimental import pallas as pl
from jax.experimental.pallas import tpu as pltpu

LANE = 128


def _round_up(v, m):
    return ((v + m - 1) // m) * m


def _largest_tile(n_pad, cap, min_blocks=1):
    """Largest multiple-of-128 divisor of n_pad that is <= cap and leaves
    at least `min_blocks` blocks (falls back to 128)."""
    m = n_pad // LANE
    best = 1
    for d in range(1, m + 1):
        if m % d == 0 and d * LANE <= cap and m // d >= min_blocks:
            best = d
    return best * LANE


def _pad2(arr, rows, cols):
    return jnp.pad(arr, ((0, rows - arr.shape[0]), (0, cols - arr.shape[1])))


# ----------------------------------------------------------------------------
# Kernel 1: simple row-tiled feature matmul  o = x @ w  (single K block,
# no accumulator scratch, no predication).
# ----------------------------------------------------------------------------
def _feature_matmul_kernel(x_ref, w_ref, o_ref):
    o_ref[...] = jnp.dot(x_ref[...], w_ref[...],
                         preferred_element_type=jnp.float32).astype(o_ref.dtype)


def _feature_matmul(x, w, *, out_dtype, tm):
    n_pad, k = x.shape
    f = w.shape[1]
    est = (2 * tm * k * x.dtype.itemsize
           + 2 * w.size * w.dtype.itemsize
           + 2 * tm * f * jnp.dtype(out_dtype).itemsize)
    vmem_limit = int(min(max(2 * est, 32 << 20), 48 << 20))
    return pl.pallas_call(
        _feature_matmul_kernel,
        out_shape=jax.ShapeDtypeStruct((n_pad, f), out_dtype),
        grid_spec=pltpu.PrefetchScalarGridSpec(
            num_scalar_prefetch=0,
            grid=(n_pad // tm,),
            in_specs=[pl.BlockSpec((tm, k), lambda i: (i, 0)),
                      pl.BlockSpec((k, f), lambda i: (0, 0))],   # resident weight
            out_specs=pl.BlockSpec((tm, f), lambda i: (i, 0)),
        ),
        compiler_params=pltpu.CompilerParams(
            dimension_semantics=("parallel",),
            vmem_limit_bytes=vmem_limit),
        cost_estimate=pl.CostEstimate(
            flops=2 * n_pad * k * f, transcendentals=0,
            bytes_accessed=(x.size * x.dtype.itemsize + w.size * w.dtype.itemsize
                            + n_pad * f * jnp.dtype(out_dtype).itemsize)),
    )(x, w)


# ----------------------------------------------------------------------------
# Kernel 2/3: A-pass aggregation   o = act(A @ B + bias) [@ W2]
# grid = (row tiles of A, contraction K tiles of A); B is VMEM-resident
# (constant index_map, sliced with pl.ds) unless too big, then streamed per K.
# ----------------------------------------------------------------------------
def _agg_kernel(a_ref, b_ref, bias_ref, o_ref, acc_ref, *,
                tk, b_resident, apply_relu):
    kk = pl.program_id(1)

    @pl.when(kk == 0)
    def _():
        acc_ref[...] = jnp.zeros_like(acc_ref)

    if b_resident:
        koff = pl.multiple_of(kk * tk, tk)
        b_blk = b_ref[pl.ds(koff, tk), :]
    else:
        b_blk = b_ref[...]
    acc_ref[...] += jnp.dot(a_ref[...], b_blk, preferred_element_type=jnp.float32)

    @pl.when(kk == pl.num_programs(1) - 1)
    def _():
        r = acc_ref[...] + bias_ref[...]
        if apply_relu:
            r = jnp.maximum(r, 0.0)
        o_ref[...] = r.astype(o_ref.dtype)


def _agg_fused_kernel(a_ref, b_ref, bias_ref, w2_ref, o_ref, acc_ref, *,
                      tk, b_resident, apply_relu):
    kk = pl.program_id(1)

    @pl.when(kk == 0)
    def _():
        acc_ref[...] = jnp.zeros_like(acc_ref)

    if b_resident:
        koff = pl.multiple_of(kk * tk, tk)
        b_blk = b_ref[pl.ds(koff, tk), :]
    else:
        b_blk = b_ref[...]
    acc_ref[...] += jnp.dot(a_ref[...], b_blk, preferred_element_type=jnp.float32)

    @pl.when(kk == pl.num_programs(1) - 1)
    def _():
        r = acc_ref[...] + bias_ref[...]
        if apply_relu:
            r = jnp.maximum(r, 0.0)
        # Fused second matmul (hidden @ W_heads) rides in MXU slack of the
        # HBM-bound A-pass; avoids writing `hidden` back to HBM at all.
        r = jnp.dot(r.astype(w2_ref.dtype), w2_ref[...],
                    preferred_element_type=jnp.float32)
        o_ref[...] = r.astype(o_ref.dtype)


def _aggregate(a, b, bias, *, w2, apply_relu, out_dtype, tm, tk):
    n_pad = a.shape[0]
    f_b = b.shape[1]
    f_out = w2.shape[1] if w2 is not None else f_b
    grid = (n_pad // tm, n_pad // tk)

    # Keep B resident in VMEM (DMA'd once) when it is small enough.
    b_resident = (b.size * b.dtype.itemsize) <= (8 << 20)

    in_specs = [pl.BlockSpec((tm, tk), lambda i, kk: (i, kk))]          # A tile
    if b_resident:
        in_specs.append(pl.BlockSpec((n_pad, f_b), lambda i, kk: (0, 0)))  # resident B
    else:
        in_specs.append(pl.BlockSpec((tk, f_b), lambda i, kk: (kk, 0)))    # streamed B
    in_specs.append(pl.BlockSpec((1, bias.shape[1]), lambda i, kk: (0, 0)))
    args = [a, b, bias]

    if w2 is not None:
        in_specs.append(pl.BlockSpec(w2.shape, lambda i, kk: (0, 0)))   # resident W2
        args.append(w2)
        kernel = functools.partial(_agg_fused_kernel, tk=tk,
                                   b_resident=b_resident, apply_relu=apply_relu)
    else:
        kernel = functools.partial(_agg_kernel, tk=tk,
                                   b_resident=b_resident, apply_relu=apply_relu)

    # Conservative VMEM budget (assume double-buffering everywhere) + margin,
    # clamped so big tiles stay safe on v7x's 64 MiB VMEM.
    est = (2 * tm * tk * a.dtype.itemsize
           + 2 * (b.size if b_resident else tk * f_b) * b.dtype.itemsize
           + 2 * bias.size * bias.dtype.itemsize
           + (2 * w2.size * w2.dtype.itemsize if w2 is not None else 0)
           + 2 * tm * f_out * jnp.dtype(out_dtype).itemsize
           + tm * f_b * 4)
    vmem_limit = int(min(max(2 * est, 32 << 20), 48 << 20))

    flops = 2 * n_pad * n_pad * f_b
    if w2 is not None:
        flops += 2 * n_pad * f_b * f_out
    bytes_accessed = (a.size * a.dtype.itemsize
                      + b.size * b.dtype.itemsize * (1 if b_resident else grid[0])
                      + n_pad * f_out * jnp.dtype(out_dtype).itemsize)

    return pl.pallas_call(
        kernel,
        out_shape=jax.ShapeDtypeStruct((n_pad, f_out), out_dtype),
        grid_spec=pltpu.PrefetchScalarGridSpec(
            num_scalar_prefetch=0,
            grid=grid,
            in_specs=in_specs,
            out_specs=pl.BlockSpec((tm, f_out), lambda i, kk: (i, 0)),
            scratch_shapes=[pltpu.VMEM((tm, f_b), jnp.float32)],
        ),
        compiler_params=pltpu.CompilerParams(
            dimension_semantics=("parallel", "arbitrary"),
            vmem_limit_bytes=vmem_limit),
        cost_estimate=pl.CostEstimate(flops=flops, transcendentals=0,
                                      bytes_accessed=bytes_accessed),
    )(*args)


# ----------------------------------------------------------------------------
# Plain-JAX glue: normalized adjacency built directly at padded size, fused
# normalize + cast (one producer, one low-precision slab written).
# ----------------------------------------------------------------------------
def _build_a_hat_padded(edge_index, n, n_pad, dtype):
    src, dst = edge_index[0], edge_index[1]
    a = jnp.zeros((n_pad, n_pad), jnp.float32).at[dst, src].add(1.0)
    idx = jnp.arange(n)
    diag = a[idx, idx]
    # add_remaining_self_loops: only add a self loop where none exists.
    a = a.at[idx, idx].add(jnp.where(diag > 0.0, 0.0, 1.0))
    deg = jnp.sum(a, axis=1)
    d_inv_sqrt = jnp.where(deg > 0.0, jax.lax.rsqrt(deg), 0.0)
    return (d_inv_sqrt[:, None] * a * d_inv_sqrt[None, :]).astype(dtype)


def glorot(key, fan_in, fan_out):
    scale = jnp.sqrt(6.0 / (fan_in + fan_out))
    return jax.random.uniform(key, (fan_in, fan_out), jnp.float32, -scale, scale)


# ----------------------------------------------------------------------------
# VGAE encoder forward.
# ----------------------------------------------------------------------------
def vgae_enc(x, edge_index, params, *, compute_dtype=jnp.bfloat16):
    n, fin = x.shape
    hid = params["w1"].shape[1]            # 2 * out_features
    out_f = params["wmu"].shape[1]

    n_pad = _round_up(n, LANE)
    fin_pad = _round_up(fin, LANE)
    hid_pad = _round_up(hid, LANE)
    heads_pad = _round_up(2 * out_f, LANE)

    # Row tile up to 1024, keeping >= 2 row blocks when possible (megacore on v7x);
    # K tile up to 512 for the A-passes.
    tm = _largest_tile(n_pad, 1024, min_blocks=2)
    tk = _largest_tile(n_pad, 512, min_blocks=1)
    # Row tile for the feature matmul capped so the X block stays <= ~8 MiB.
    row_cap = max(LANE, ((8 << 20) // (fin_pad * 2)) // LANE * LANE)
    tm_f = _largest_tile(n_pad, min(1024, row_cap), min_blocks=2)

    a_p = _build_a_hat_padded(edge_index, n, n_pad, compute_dtype)
    x_p = _pad2(x, n_pad, fin_pad).astype(compute_dtype)
    w1_p = _pad2(params["w1"], fin_pad, hid_pad).astype(compute_dtype)
    b1_p = _pad2(params["b1"].reshape(1, -1), 1, hid_pad).astype(jnp.float32)

    # Fused heads: one weight slab [2H, 2*OUT] -> a single A-pass serves mu and sigma.
    w_heads = jnp.concatenate([params["wmu"], params["wsig"]], axis=1)
    b_heads = jnp.concatenate([params["bmu"], params["bsig"]], axis=0).reshape(1, -1)
    wh_p = _pad2(w_heads, hid_pad, heads_pad).astype(compute_dtype)
    bh_p = _pad2(b_heads, 1, heads_pad).astype(jnp.float32)

    # ---- pass 1: xw = X @ W1 (small feature matmul) ----
    xw = _feature_matmul(x_p, w1_p, out_dtype=compute_dtype, tm=tm_f)

    # ---- pass 2 (fused): hw = relu(A @ xw + b1) @ W_heads ----
    hw = _aggregate(a_p, xw, b1_p, w2=wh_p, apply_relu=True,
                    out_dtype=compute_dtype, tm=tm, tk=tk)

    # ---- pass 3: [mu | sigma] = A @ hw + b_heads ----
    heads = _aggregate(a_p, hw, bh_p, w2=None, apply_relu=False,
                       out_dtype=jnp.float32, tm=tm, tk=tk)

    mu = heads[:n, :out_f]
    sigma = heads[:n, out_f:2 * out_f]
    return mu, sigma


def vgae_enc_reference(x, edge_index, params):
    n = x.shape[0]
    a_hat = _build_a_hat_padded(edge_index, n, n, jnp.float32)
    h = jnp.maximum(a_hat @ (x @ params["w1"]) + params["b1"], 0.0)
    mu = a_hat @ (h @ params["wmu"]) + params["bmu"]
    sigma = a_hat @ (h @ params["wsig"]) + params["bsig"]
    return mu, sigma


def _make_inputs(key, n, in_features, out_features):
    kx, k1, k2, k3 = jax.random.split(key, 4)
    hid = 2 * out_features
    params = {
        "w1":   glorot(k1, in_features, hid),
        "b1":   jnp.zeros((hid,), jnp.float32),
        "wmu":  glorot(k2, hid, out_features),
        "bmu":  jnp.zeros((out_features,), jnp.float32),
        "wsig": glorot(k3, hid, out_features),
        "bsig": jnp.zeros((out_features,), jnp.float32),
    }
    x = jax.random.normal(kx, (n, in_features), jnp.float32)
    # Deterministic undirected ring graph: edge_index [2, 2N].
    idx = jnp.arange(n)
    nxt = (idx + 1) % n
    edge_index = jnp.stack([jnp.concatenate([idx, nxt]),
                            jnp.concatenate([nxt, idx])], axis=0).astype(jnp.int32)
    return x, edge_index, params


if __name__ == "__main__":
    vgae_enc_jit = jax.jit(vgae_enc)

    # --- small test (matches the module's nominal shapes) ---
    N, IN_FEATURES, OUT_FEATURES = 16, 8, 4
    x, edge_index, params = _make_inputs(jax.random.PRNGKey(0), N, IN_FEATURES, OUT_FEATURES)
    mu, sigma = jax.block_until_ready(vgae_enc_jit(x, edge_index, params))
    mu_ref, sigma_ref = vgae_enc_reference(x, edge_index, params)
    assert mu.shape == (N, OUT_FEATURES) and sigma.shape == (N, OUT_FEATURES)
    assert jnp.allclose(mu, mu_ref, atol=5e-2, rtol=5e-2), "mu mismatch vs reference"
    assert jnp.allclose(sigma, sigma_ref, atol=5e-2, rtol=5e-2), "sigma mismatch vs reference"

    # --- larger test: exercises multi-tile grid, K accumulation, resident-B slicing ---
    N2, IN2, OUT2 = 700, 40, 16
    x2, ei2, params2 = _make_inputs(jax.random.PRNGKey(0), N2, IN2, OUT2)
    mu2, sigma2 = jax.block_until_ready(vgae_enc_jit(x2, ei2, params2))
    mu2_ref, sigma2_ref = vgae_enc_reference(x2, ei2, params2)
    assert mu2.shape == (N2, OUT2) and sigma2.shape == (N2, OUT2)
    assert jnp.allclose(mu2, mu2_ref, atol=1e-1, rtol=1e-1), "mu mismatch (large) vs reference"
    assert jnp.allclose(sigma2, sigma2_ref, atol=1e-1, rtol=1e-1), "sigma mismatch (large) vs reference"

    print("KERNEL_OK")
</pallas_src>

<mosaic_0001>
module attributes {stable_mosaic.version = 11 : i64} {
  func.func @_feature_matmul_kernel(%arg0: i32, %arg1: memref<128x128xbf16, #tpu.memory_space<vmem>>, %arg2: memref<128x128xbf16, #tpu.memory_space<vmem>>, %arg3: memref<128x128xbf16, #tpu.memory_space<vmem>>) attributes {dimension_semantics = [#tpu.dimension_semantics<parallel>], iteration_bounds = array<i64: 1>, scalar_prefetch = 0 : i64, scratch_operands = 0 : i64, tpu.core_type = #tpu.core_type<tc>, window_params = [{transform_indices = @transform_0, window_bounds = array<i64: 128, 128>}, {pipeline_mode = #tpu.pipeline_mode<synchronous>, transform_indices = @transform_1, window_bounds = array<i64: 128, 128>}, {transform_indices = @transform_2, window_bounds = array<i64: 128, 128>}]} {
    %c0 = arith.constant 0 : index
    %c0_0 = arith.constant 0 : index
    %0 = vector.load %arg1[%c0, %c0_0] : memref<128x128xbf16, #tpu.memory_space<vmem>>, vector<128x128xbf16>
    %c0_1 = arith.constant 0 : index
    %c0_2 = arith.constant 0 : index
    %1 = vector.load %arg2[%c0_1, %c0_2] : memref<128x128xbf16, #tpu.memory_space<vmem>>, vector<128x128xbf16>
    %cst = arith.constant dense<0.000000e+00> : vector<128x128xf32>
    %2 = tpu.matmul %0, %1, %cst {dimension_numbers = #tpu.dot_dimension_numbers<[1], [0], [0], [1], [0, 0, 1, 1], [], []>} : vector<128x128xbf16>, vector<128x128xbf16>, vector<128x128xf32> -> vector<128x128xf32>
    %3 = arith.truncf %2 : vector<128x128xf32> to vector<128x128xbf16>
    %c0_3 = arith.constant 0 : index
    %c0_4 = arith.constant 0 : index
    %4 = vector.load %arg3[%c0_3, %c0_4] : memref<128x128xbf16, #tpu.memory_space<vmem>>, vector<128x128xbf16>
    tpu.vector_store %arg3[%c0_3, %c0_4], %3 {strides = array<i32>} : memref<128x128xbf16, #tpu.memory_space<vmem>>, vector<128x128xbf16>,
    return
  }
  func.func @transform_0(%arg0: i32) -> (i32, i32) {
    %c0_i32 = arith.constant 0 : i32
    %c0_i32_0 = arith.constant 0 : i32
    return %arg0, %c0_i32 : i32, i32
  }
  func.func @transform_1(%arg0: i32) -> (i32, i32) {
    %c0_i32 = arith.constant 0 : i32
    %c0_i32_0 = arith.constant 0 : i32
    %c0_i32_1 = arith.constant 0 : i32
    return %c0_i32, %c0_i32_0 : i32, i32
  }
  func.func @transform_2(%arg0: i32) -> (i32, i32) {
    %c0_i32 = arith.constant 0 : i32
    %c0_i32_0 = arith.constant 0 : i32
    return %arg0, %c0_i32 : i32, i32
  }
}

module attributes {stable_mosaic.version = 11 : i64} {
  func.func @_agg_fused_kernel(%arg0: i32, %arg1: i32, %arg2: memref<128x128xbf16, #tpu.memory_space<vmem>>, %arg3: memref<128x128xbf16, #tpu.memory_space<vmem>>, %arg4: memref<1x128xf32, #tpu.memory_space<vmem>>, %arg5: memref<128x128xbf16, #tpu.memory_space<vmem>>, %arg6: memref<128x128xbf16, #tpu.memory_space<vmem>>, %arg7: memref<128x128xf32, #tpu.memory_space<vmem>>) attributes {dimension_semantics = [#tpu.dimension_semantics<parallel>, #tpu.dimension_semantics<arbitrary>], iteration_bounds = array<i64: 1, 1>, scalar_prefetch = 0 : i64, scratch_operands = 1 : i64, tpu.core_type = #tpu.core_type<tc>, window_params = [{transform_indices = @transform_0, window_bounds = array<i64: 128, 128>}, {pipeline_mode = #tpu.pipeline_mode<synchronous>, transform_indices = @transform_1, window_bounds = array<i64: 128, 128>}, {pipeline_mode = #tpu.pipeline_mode<synchronous>, transform_indices = @transform_2, window_bounds = array<i64: 1, 128>}, {pipeline_mode = #tpu.pipeline_mode<synchronous>, transform_indices = @transform_3, window_bounds = array<i64: 128, 128>}, {transform_indices = @transform_4, window_bounds = array<i64: 128, 128>}]} {
    %c0_i32 = arith.constant 0 : i32
    %0 = arith.cmpi eq, %arg1, %c0_i32 : i32
    %1 = arith.extui %0 : i1 to i32
    %c0_i32_0 = arith.constant 0 : i32
    %2 = arith.cmpi ne, %1, %c0_i32_0 : i32
    scf.if %2 {
      %cst_9 = arith.constant 0.000000e+00 : f32
      %15 = vector.broadcast %cst_9 : f32 to vector<128x128xf32>
      %c0_10 = arith.constant 0 : index
      %c0_11 = arith.constant 0 : index
      %16 = vector.load %arg7[%c0_10, %c0_11] : memref<128x128xf32, #tpu.memory_space<vmem>>, vector<128x128xf32>
      tpu.vector_store %arg7[%c0_10, %c0_11], %15 {strides = array<i32>} : memref<128x128xf32, #tpu.memory_space<vmem>>, vector<128x128xf32>,
    } else {
    }
    %c128_i32 = arith.constant 128 : i32
    %3 = arith.muli %arg1, %c128_i32 : i32
    %4 = tpu.assume_multiple %3, 128 : i32
    %5 = arith.index_cast %4 : i32 to index
    %c0 = arith.constant 0 : index
    %6 = vector.load %arg3[%5, %c0] : memref<128x128xbf16, #tpu.memory_space<vmem>>, vector<128x128xbf16>
    %c0_1 = arith.constant 0 : index
    %c0_2 = arith.constant 0 : index
    %7 = vector.load %arg7[%c0_1, %c0_2] : memref<128x128xf32, #tpu.memory_space<vmem>>, vector<128x128xf32>
    %c0_3 = arith.constant 0 : index
    %c0_4 = arith.constant 0 : index
    %8 = vector.load %arg2[%c0_3, %c0_4] : memref<128x128xbf16, #tpu.memory_space<vmem>>, vector<128x128xbf16>
    %cst = arith.constant dense<0.000000e+00> : vector<128x128xf32>
    %9 = tpu.matmul %8, %6, %cst {dimension_numbers = #tpu.dot_dimension_numbers<[1], [0], [0], [1], [0, 0, 1, 1], [], []>} : vector<128x128xbf16>, vector<128x128xbf16>, vector<128x128xf32> -> vector<128x128xf32>
    %10 = arith.addf %7, %9 : vector<128x128xf32>
    %c0_5 = arith.constant 0 : index
    %c0_6 = arith.constant 0 : index
    %11 = vector.load %arg7[%c0_5, %c0_6] : memref<128x128xf32, #tpu.memory_space<vmem>>, vector<128x128xf32>
    tpu.vector_store %arg7[%c0_5, %c0_6], %10 {strides = array<i32>} : memref<128x128xf32, #tpu.memory_space<vmem>>, vector<128x128xf32>,
    %c0_i32_7 = arith.constant 0 : i32
    %12 = arith.cmpi eq, %arg1, %c0_i32_7 : i32
    %13 = arith.extui %12 : i1 to i32
    %c0_i32_8 = arith.constant 0 : i32
    %14 = arith.cmpi ne, %13, %c0_i32_8 : i32
    scf.if %14 {
      %c0_9 = arith.constant 0 : index
      %c0_10 = arith.constant 0 : index
      %15 = vector.load %arg7[%c0_9, %c0_10] : memref<128x128xf32, #tpu.memory_space<vmem>>, vector<128x128xf32>
      %c0_11 = arith.constant 0 : index
      %c0_12 = arith.constant 0 : index
      %16 = vector.load %arg4[%c0_11, %c0_12] : memref<1x128xf32, #tpu.memory_space<vmem>>, vector<1x128xf32>
      %17 = vector.broadcast %16 : vector<1x128xf32> to vector<128x128xf32>
      %18 = arith.addf %15, %17 : vector<128x128xf32>
      %cst_13 = arith.constant 0.000000e+00 : f32
      %19 = vector.broadcast %cst_13 : f32 to vector<128x128xf32>
      %20 = arith.maximumf %18, %19 : vector<128x128xf32>
      %21 = arith.truncf %20 : vector<128x128xf32> to vector<128x128xbf16>
      %c0_14 = arith.constant 0 : index
      %c0_15 = arith.constant 0 : index
      %22 = vector.load %arg5[%c0_14, %c0_15] : memref<128x128xbf16, #tpu.memory_space<vmem>>, vector<128x128xbf16>
      %cst_16 = arith.constant dense<0.000000e+00> : vector<128x128xf32>
      %23 = tpu.matmul %21, %22, %cst_16 {dimension_numbers = #tpu.dot_dimension_numbers<[1], [0], [0], [1], [0, 0, 1, 1], [], []>} : vector<128x128xbf16>, vector<128x128xbf16>, vector<128x128xf32> -> vector<128x128xf32>
      %24 = arith.truncf %23 : vector<128x128xf32> to vector<128x128xbf16>
      %c0_17 = arith.constant 0 : index
      %c0_18 = arith.constant 0 : index
      %25 = vector.load %arg6[%c0_17, %c0_18] : memref<128x128xbf16, #tpu.memory_space<vmem>>, vector<128x128xbf16>
      tpu.vector_store %arg6[%c0_17, %c0_18], %24 {strides = array<i32>} : memref<128x128xbf16, #tpu.memory_space<vmem>>, vector<128x128xbf16>,
    } else {
    }
    return
  }
  func.func @transform_0(%arg0: i32, %arg1: i32) -> (i32, i32) {
    %c0_i32 = arith.constant 0 : i32
    return %arg0, %arg1 : i32, i32
  }
  func.func @transform_1(%arg0: i32, %arg1: i32) -> (i32, i32) {
    %c0_i32 = arith.constant 0 : i32
    %c0_i32_0 = arith.constant 0 : i32
    %c0_i32_1 = arith.constant 0 : i32
    return %c0_i32, %c0_i32_0 : i32, i32
  }
  func.func @transform_2(%arg0: i32, %arg1: i32) -> (i32, i32) {
    %c0_i32 = arith.constant 0 : i32
    %c0_i32_0 = arith.constant 0 : i32
    %c0_i32_1 = arith.constant 0 : i32
    return %c0_i32, %c0_i32_0 : i32, i32
  }
  func.func @transform_3(%arg0: i32, %arg1: i32) -> (i32, i32) {
    %c0_i32 = arith.constant 0 : i32
    %c0_i32_0 = arith.constant 0 : i32
    %c0_i32_1 = arith.constant 0 : i32
    return %c0_i32, %c0_i32_0 : i32, i32
  }
  func.func @transform_4(%arg0: i32, %arg1: i32) -> (i32, i32) {
    %c0_i32 = arith.constant 0 : i32
    %c0_i32_0 = arith.constant 0 : i32
    return %arg0, %c0_i32 : i32, i32
  }
}

module attributes {stable_mosaic.version = 11 : i64} {
  func.func @_agg_kernel(%arg0: i32, %arg1: i32, %arg2: memref<128x128xbf16, #tpu.memory_space<vmem>>, %arg3: memref<128x128xbf16, #tpu.memory_space<vmem>>, %arg4: memref<1x128xf32, #tpu.memory_space<vmem>>, %arg5: memref<128x128xf32, #tpu.memory_space<vmem>>, %arg6: memref<128x128xf32, #tpu.memory_space<vmem>>) attributes {dimension_semantics = [#tpu.dimension_semantics<parallel>, #tpu.dimension_semantics<arbitrary>], iteration_bounds = array<i64: 1, 1>, scalar_prefetch = 0 : i64, scratch_operands = 1 : i64, tpu.core_type = #tpu.core_type<tc>, window_params = [{transform_indices = @transform_0, window_bounds = array<i64: 128, 128>}, {pipeline_mode = #tpu.pipeline_mode<synchronous>, transform_indices = @transform_1, window_bounds = array<i64: 128, 128>}, {pipeline_mode = #tpu.pipeline_mode<synchronous>, transform_indices = @transform_2, window_bounds = array<i64: 1, 128>}, {transform_indices = @transform_3, window_bounds = array<i64: 128, 128>}]} {
    %c0_i32 = arith.constant 0 : i32
    %0 = arith.cmpi eq, %arg1, %c0_i32 : i32
    %1 = arith.extui %0 : i1 to i32
    %c0_i32_0 = arith.constant 0 : i32
    %2 = arith.cmpi ne, %1, %c0_i32_0 : i32
    scf.if %2 {
      %cst_9 = arith.constant 0.000000e+00 : f32
      %15 = vector.broadcast %cst_9 : f32 to vector<128x128xf32>
      %c0_10 = arith.constant 0 : index
      %c0_11 = arith.constant 0 : index
      %16 = vector.load %arg6[%c0_10, %c0_11] : memref<128x128xf32, #tpu.memory_space<vmem>>, vector<128x128xf32>
      tpu.vector_store %arg6[%c0_10, %c0_11], %15 {strides = array<i32>} : memref<128x128xf32, #tpu.memory_space<vmem>>, vector<128x128xf32>,
    } else {
    }
    %c128_i32 = arith.constant 128 : i32
    %3 = arith.muli %arg1, %c128_i32 : i32
    %4 = tpu.assume_multiple %3, 128 : i32
    %5 = arith.index_cast %4 : i32 to index
    %c0 = arith.constant 0 : index
    %6 = vector.load %arg3[%5, %c0] : memref<128x128xbf16, #tpu.memory_space<vmem>>, vector<128x128xbf16>
    %c0_1 = arith.constant 0 : index
    %c0_2 = arith.constant 0 : index
    %7 = vector.load %arg6[%c0_1, %c0_2] : memref<128x128xf32, #tpu.memory_space<vmem>>, vector<128x128xf32>
    %c0_3 = arith.constant 0 : index
    %c0_4 = arith.constant 0 : index
    %8 = vector.load %arg2[%c0_3, %c0_4] : memref<128x128xbf16, #tpu.memory_space<vmem>>, vector<128x128xbf16>
    %cst = arith.constant dense<0.000000e+00> : vector<128x128xf32>
    %9 = tpu.matmul %8, %6, %cst {dimension_numbers = #tpu.dot_dimension_numbers<[1], [0], [0], [1], [0, 0, 1, 1], [], []>} : vector<128x128xbf16>, vector<128x128xbf16>, vector<128x128xf32> -> vector<128x128xf32>
    %10 = arith.addf %7, %9 : vector<128x128xf32>
    %c0_5 = arith.constant 0 : index
    %c0_6 = arith.constant 0 : index
    %11 = vector.load %arg6[%c0_5, %c0_6] : memref<128x128xf32, #tpu.memory_space<vmem>>, vector<128x128xf32>
    tpu.vector_store %arg6[%c0_5, %c0_6], %10 {strides = array<i32>} : memref<128x128xf32, #tpu.memory_space<vmem>>, vector<128x128xf32>,
    %c0_i32_7 = arith.constant 0 : i32
    %12 = arith.cmpi eq, %arg1, %c0_i32_7 : i32
    %13 = arith.extui %12 : i1 to i32
    %c0_i32_8 = arith.constant 0 : i32
    %14 = arith.cmpi ne, %13, %c0_i32_8 : i32
    scf.if %14 {
      %c0_9 = arith.constant 0 : index
      %c0_10 = arith.constant 0 : index
      %15 = vector.load %arg6[%c0_9, %c0_10] : memref<128x128xf32, #tpu.memory_space<vmem>>, vector<128x128xf32>
      %c0_11 = arith.constant 0 : index
      %c0_12 = arith.constant 0 : index
      %16 = vector.load %arg4[%c0_11, %c0_12] : memref<1x128xf32, #tpu.memory_space<vmem>>, vector<1x128xf32>
      %17 = vector.broadcast %16 : vector<1x128xf32> to vector<128x128xf32>
      %18 = arith.addf %15, %17 : vector<128x128xf32>
      %c0_13 = arith.constant 0 : index
      %c0_14 = arith.constant 0 : index
      %19 = vector.load %arg5[%c0_13, %c0_14] : memref<128x128xf32, #tpu.memory_space<vmem>>, vector<128x128xf32>
      tpu.vector_store %arg5[%c0_13, %c0_14], %18 {strides = array<i32>} : memref<128x128xf32, #tpu.memory_space<vmem>>, vector<128x128xf32>,
    } else {
    }
    return
  }
  func.func @transform_0(%arg0: i32, %arg1: i32) -> (i32, i32) {
    %c0_i32 = arith.constant 0 : i32
    return %arg0, %arg1 : i32, i32
  }
  func.func @transform_1(%arg0: i32, %arg1: i32) -> (i32, i32) {
    %c0_i32 = arith.constant 0 : i32
    %c0_i32_0 = arith.constant 0 : i32
    %c0_i32_1 = arith.constant 0 : i32
    return %c0_i32, %c0_i32_0 : i32, i32
  }
  func.func @transform_2(%arg0: i32, %arg1: i32) -> (i32, i32) {
    %c0_i32 = arith.constant 0 : i32
    %c0_i32_0 = arith.constant 0 : i32
    %c0_i32_1 = arith.constant 0 : i32
    return %c0_i32, %c0_i32_0 : i32, i32
  }
  func.func @transform_3(%arg0: i32, %arg1: i32) -> (i32, i32) {
    %c0_i32 = arith.constant 0 : i32
    %c0_i32_0 = arith.constant 0 : i32
    return %arg0, %c0_i32 : i32, i32
  }
}

</mosaic_0001>

<llo_original>
// kernel: vgae_enc.3
$region0: #{vgae_enc.3}
  #allocation0 [shape = 'u32[]', space=smem, size = 0x4, offset = 0x4, fixed_abs, tag = 'smem constant byte address 0x4 - core index']
  #allocation1 [shape = 'u32[72,128]{1,0:T(1,128)}', space=vmem, size = 0x9000, scoped, tag = 'internal scratch']
  %s0 = inlined_call_operand.vmem [shape: bf16[128,128], index: 0, kind: input, shape index: {}]
  %s1 = inlined_call_operand.vmem [shape: bf16[128,128], index: 1, kind: input, shape index: {}]
  %s2 = inlined_call_operand.vmem [shape: bf16[128,128], index: 2, kind: output, shape index: {}]
  %s3 = sld [smem:[#allocation0]]
  $region18: #{vgae_enc.3} parent=0
    _
  %s5 = ssub.s32 1, %s3
  %s6 = scalar_select 0, %s5, %s3
  // Predicated region
  $region2: #{vgae_enc.3} parent=0 // pred_check
    _
  $region3: #{vgae_enc.3} parent=0 // pred_check_branch
    %8 = sbr.rel (0) target = $region5
  $region4: #{vgae_enc.3} parent=0 // pred_region
    _
  $region5: #{vgae_enc.3} parent=0 // pred_fallthru
    _
  // Predicated region
  $region6: #{vgae_enc.3} parent=0 // pred_check
    _
  $region7: #{vgae_enc.3} parent=0 // pred_check_branch
    %10 = sbr.rel (0) target = $region9
  $region8: #{vgae_enc.3} parent=0 // pred_region
    _
  $region9: #{vgae_enc.3} parent=0 // pred_fallthru
    _
  %v11 = vld [vmem:[%s0] sm:$0xf]
  %v12 = vld [vmem:[%s0 + $0x4] sm:$0xf]
  %v13 = vld [vmem:[%s0 + $0x8] sm:$0xf]
  %v14 = vld [vmem:[%s0 + $0xc] sm:$0xf]
  %v15 = vld [vmem:[%s0 + $0x10] sm:$0xf]
  %v16 = vld [vmem:[%s0 + $0x14] sm:$0xf]
  %v17 = vld [vmem:[%s0 + $0x18] sm:$0xf]
  %v18 = vld [vmem:[%s0 + $0x1c] sm:$0xf]
  %v19 = vld [vmem:[%s0 + $0x20] sm:$0xf]
  %v20 = vld [vmem:[%s0 + $0x24] sm:$0xf]
  %v21 = vld [vmem:[%s0 + $0x28] sm:$0xf]
  %v22 = vld [vmem:[%s0 + $0x2c] sm:$0xf]
  %v23 = vld [vmem:[%s0 + $0x30] sm:$0xf]
  %v24 = vld [vmem:[%s0 + $0x34] sm:$0xf]
  %v25 = vld [vmem:[%s0 + $0x38] sm:$0xf]
  %v26 = vld [vmem:[%s0 + $0x3c] sm:$0xf]
  %v27 = vld [vmem:[%s1] sm:$0xf]
  %v28 = vld [vmem:[%s1 + $0x4] sm:$0xf]
  %v29 = vld [vmem:[%s1 + $0x8] sm:$0xf]
  %v30 = vld [vmem:[%s1 + $0xc] sm:$0xf]
  %v31 = vld [vmem:[%s1 + $0x10] sm:$0xf]
  %v32 = vld [vmem:[%s1 + $0x14] sm:$0xf]
  %v33 = vld [vmem:[%s1 + $0x18] sm:$0xf]
  %v34 = vld [vmem:[%s1 + $0x1c] sm:$0xf]
  %v35 = vld [vmem:[%s1 + $0x20] sm:$0xf]
  %v36 = vld [vmem:[%s1 + $0x24] sm:$0xf]
  %v37 = vld [vmem:[%s1 + $0x28] sm:$0xf]
  %v38 = vld [vmem:[%s1 + $0x2c] sm:$0xf]
  %v39 = vld [vmem:[%s1 + $0x30] sm:$0xf]
  %v40 = vld [vmem:[%s1 + $0x34] sm:$0xf]
  %v41 = vld [vmem:[%s1 + $0x38] sm:$0xf]
  %v42 = vld [vmem:[%s1 + $0x3c] sm:$0xf]
  %v59 = vunpack.c.l.b16 %v11
  %v60 = vunpack.c.l.b16 %v12
  %v61 = vunpack.c.l.b16 %v13
  %v62 = vunpack.c.l.b16 %v14
  %v63 = vunpack.c.l.b16 %v15
  %v64 = vunpack.c.l.b16 %v16
  %v65 = vunpack.c.l.b16 %v17
  %v66 = vunpack.c.l.b16 %v18
  %v67 = vunpack.c.l.b16 %v19
  %v68 = vunpack.c.l.b16 %v20
  %v69 = vunpack.c.l.b16 %v21
  %v70 = vunpack.c.l.b16 %v22
  %v71 = vunpack.c.l.b16 %v23
  %v72 = vunpack.c.l.b16 %v24
  %v73 = vunpack.c.l.b16 %v25
  %v74 = vunpack.c.l.b16 %v26
  %v75 = vpack.c.b16 %v60, %v59
  %v76 = vpack.c.b16 %v62, %v61
  %v77 = vpack.c.b16 %v64, %v63
  %v78 = vpack.c.b16 %v66, %v65
  %v79 = vpack.c.b16 %v68, %v67
  %v80 = vpack.c.b16 %v70, %v69
  %v81 = vpack.c.b16 %v72, %v71
  %v82 = vpack.c.b16 %v74, %v73
  %v107 = vunpack.c.l.b16 %v27
  %v108 = vunpack.c.l.b16 %v28
  %v109 = vunpack.c.l.b16 %v29
  %v110 = vunpack.c.l.b16 %v30
  %v111 = vunpack.c.l.b16 %v31
  %v112 = vunpack.c.l.b16 %v32
  %v113 = vunpack.c.l.b16 %v33
  %v114 = vunpack.c.l.b16 %v34
  %v115 = vunpack.c.l.b16 %v35
  %v116 = vunpack.c.l.b16 %v36
  %v117 = vunpack.c.l.b16 %v37
  %v118 = vunpack.c.l.b16 %v38
  %v119 = vunpack.c.l.b16 %v39
  %v120 = vunpack.c.l.b16 %v40
  %v121 = vunpack.c.l.b16 %v41
  %v122 = vunpack.c.l.b16 %v42
  %v123 = vpack.c.b16 %v108, %v107
  %v124 = vpack.c.b16 %v110, %v109
  %v125 = vpack.c.b16 %v112, %v111
  %v126 = vpack.c.b16 %v114, %v113
  %v127 = vpack.c.b16 %v116, %v115
  %v128 = vpack.c.b16 %v118, %v117
  %v129 = vpack.c.b16 %v120, %v119
  %v130 = vpack.c.b16 %v122, %v121
  %139 = vmatpush.bf16.msra.mxu0 %v130
  %140 = vmatpush.bf16.msra.mxu0 %v129
  %141 = vmatpush.bf16.msra.mxu0 %v128
  %142 = vmatpush.bf16.msra.mxu0 %v127
  %143 = vmatpush.bf16.msra.mxu0 %v126
  %144 = vmatpush.bf16.msra.mxu0 %v125
  %145 = vmatpush.bf16.msra.mxu0 %v124
  %146 = vmatpush.bf16.msra.mxu0 %v123
  %147 = vmatmul.bf16.gmra.mxu0 %v75
  %v148 = vpop.f32.mrf.mxu0
  %v149 = vadd.f32 0.0, %v148
  %v150 = vpop.f32.mrf.mxu0
  %v151 = vadd.f32 0.0, %v150
  %152 = vmatmul.bf16.gmra.mxu0 %v76
  %v153 = vpop.f32.mrf.mxu0
  %v154 = vadd.f32 0.0, %v153
  %v155 = vpop.f32.mrf.mxu0
  %v156 = vadd.f32 0.0, %v155
  %157 = vmatmul.bf16.gmra.mxu0 %v77
  %v158 = vpop.f32.mrf.mxu0
  %v159 = vadd.f32 0.0, %v158
  %v160 = vpop.f32.mrf.mxu0
  %v161 = vadd.f32 0.0, %v160
  %162 = vmatmul.bf16.gmra.mxu0 %v78
  %v163 = vpop.f32.mrf.mxu0
  %v164 = vadd.f32 0.0, %v163
  %v165 = vpop.f32.mrf.mxu0
  %v166 = vadd.f32 0.0, %v165
  %167 = vmatmul.bf16.gmra.mxu0 %v79
  %v168 = vpop.f32.mrf.mxu0
  %v169 = vadd.f32 0.0, %v168
  %v170 = vpop.f32.mrf.mxu0
  %v171 = vadd.f32 0.0, %v170
  %172 = vmatmul.bf16.gmra.mxu0 %v80
  %v173 = vpop.f32.mrf.mxu0
  %v174 = vadd.f32 0.0, %v173
  %v175 = vpop.f32.mrf.mxu0
  %v176 = vadd.f32 0.0, %v175
  %177 = vmatmul.bf16.gmra.mxu0 %v81
  %v178 = vpop.f32.mrf.mxu0
  %v179 = vadd.f32 0.0, %v178
  %v180 = vpop.f32.mrf.mxu0
  %v181 = vadd.f32 0.0, %v180
  %182 = vmatmul.bf16.gmra.mxu0 %v82
  %v183 = vpop.f32.mrf.mxu0
  %v184 = vadd.f32 0.0, %v183
  %v185 = vpop.f32.mrf.mxu0
  %v186 = vadd.f32 0.0, %v185
  %187 = vdwg.mxu0
  %v188 = vpack.c.bf16 %v149, %v149
  %v189 = vpack.c.bf16 %v151, %v151
  %v190 = vpack.c.bf16 %v154, %v154
  %v191 = vpack.c.bf16 %v156, %v156
  %v192 = vpack.c.bf16 %v159, %v159
  %v193 = vpack.c.bf16 %v161, %v161
  %v194 = vpack.c.bf16 %v164, %v164
  %v195 = vpack.c.bf16 %v166, %v166
  %v196 = vpack.c.bf16 %v169, %v169
  %v197 = vpack.c.bf16 %v171, %v171
  %v198 = vpack.c.bf16 %v174, %v174
  %v199 = vpack.c.bf16 %v176, %v176
  %v200 = vpack.c.bf16 %v179, %v179
  %v201 = vpack.c.bf16 %v181, %v181
  %v202 = vpack.c.bf16 %v184, %v184
  %v203 = vpack.c.bf16 %v186, %v186
  %204 = vst [vmem:[%s2] sm:$0xf] %v188
  %205 = vst [vmem:[%s2 + $0x4] sm:$0xf] %v189
  %206 = vst [vmem:[%s2 + $0x8] sm:$0xf] %v190
  %207 = vst [vmem:[%s2 + $0xc] sm:$0xf] %v191
  %208 = vst [vmem:[%s2 + $0x10] sm:$0xf] %v192
  %209 = vst [vmem:[%s2 + $0x14] sm:$0xf] %v193
  %210 = vst [vmem:[%s2 + $0x18] sm:$0xf] %v194
  %211 = vst [vmem:[%s2 + $0x1c] sm:$0xf] %v195
  %212 = vst [vmem:[%s2 + $0x20] sm:$0xf] %v196
  %213 = vst [vmem:[%s2 + $0x24] sm:$0xf] %v197
  %214 = vst [vmem:[%s2 + $0x28] sm:$0xf] %v198
  %215 = vst [vmem:[%s2 + $0x2c] sm:$0xf] %v199
  %216 = vst [vmem:[%s2 + $0x30] sm:$0xf] %v200
  %217 = vst [vmem:[%s2 + $0x34] sm:$0xf] %v201
  %218 = vst [vmem:[%s2 + $0x38] sm:$0xf] %v202
  %219 = vst [vmem:[%s2 + $0x3c] sm:$0xf] %v203
  // Predicated region
  $region10: #{vgae_enc.3} parent=0 // pred_check
    _
  $region11: #{vgae_enc.3} parent=0 // pred_check_branch
    %221 = sbr.rel (0) target = $region13
  $region12: #{vgae_enc.3} parent=0 // pred_region
    _
  $region13: #{vgae_enc.3} parent=0 // pred_fallthru
    _
  // Predicated region
  $region14: #{vgae_enc.3} parent=0 // pred_check
    _
  $region15: #{vgae_enc.3} parent=0 // pred_check_branch
    %223 = sbr.rel (0) target = $region17
  $region16: #{vgae_enc.3} parent=0 // pred_region
    _
  $region17: #{vgae_enc.3} parent=0 // pred_fallthru
    _

// kernel: vgae_enc.4
$region0: #{vgae_enc.4}
  #allocation0 [shape = 'u32[]', space=smem, size = 0x4, offset = 0x4, fixed_abs, tag = 'smem constant byte address 0x4 - core index']
  #allocation1 [shape = 'u32[72,128]{1,0:T(1,128)}', space=vmem, size = 0x9000, scoped, tag = 'internal scratch']
  #allocation2 [shape = 'f32[128,128]{1,0:T(8,128)}', space=vmem, size = 0x10000, scoped, tag = 'scratch operand']
  %s0 = inlined_call_operand.vmem [shape: bf16[128,128], index: 0, kind: input, shape index: {}]
  %s1 = inlined_call_operand.vmem [shape: bf16[128,128], index: 1, kind: input, shape index: {}]
  %s2 = inlined_call_operand.vmem [shape: f32[1,128], index: 2, kind: input, shape index: {}]
  %s3 = inlined_call_operand.vmem [shape: bf16[128,128], index: 3, kind: input, shape index: {}]
  %s4 = inlined_call_operand.vmem [shape: bf16[128,128], index: 4, kind: output, shape index: {}]
  %s5 = sld [smem:[#allocation0]]
  $region34: #{vgae_enc.4} parent=0
    _
  %s7 = ssub.s32 1, %s5
  %s8 = scalar_select 0, %s7, %s5
  // Predicated region
  $region2: #{vgae_enc.4} parent=0 // pred_check
    _
  $region3: #{vgae_enc.4} parent=0 // pred_check_branch
    %10 = sbr.rel (0) target = $region5
  $region4: #{vgae_enc.4} parent=0 // pred_region
    _
  $region5: #{vgae_enc.4} parent=0 // pred_fallthru
    _
  // Predicated region
  $region6: #{vgae_enc.4} parent=0 // pred_check
    _
  $region7: #{vgae_enc.4} parent=0 // pred_check_branch
    %12 = sbr.rel (0) target = $region9
  $region8: #{vgae_enc.4} parent=0 // pred_region
    _
  $region9: #{vgae_enc.4} parent=0 // pred_fallthru
    _
  // Predicated region
  $region10: #{vgae_enc.4} parent=0 // pred_check
    _
  $region11: #{vgae_enc.4} parent=0 // pred_check_branch
    %14 = sbr.rel (0) target = $region13
  $region12: #{vgae_enc.4} parent=0 // pred_region
    _
  $region13: #{vgae_enc.4} parent=0 // pred_fallthru
    _
  // Predicated region
  $region14: #{vgae_enc.4} parent=0 // pred_check
    _
  $region15: #{vgae_enc.4} parent=0 // pred_check_branch
    %16 = sbr.rel (0) target = $region17
  $region16: #{vgae_enc.4} parent=0 // pred_region
    _
  $region17: #{vgae_enc.4} parent=0 // pred_fallthru
    _
  %p17 = scmp.eq.s32.totalorder 0, 0
  // Predicated region
  $region18: #{vgae_enc.4} parent=0 // pred_check
    %p18 = pneg %p17
  $region19: #{vgae_enc.4} parent=0 // pred_check_branch
    %20 = sbr.rel (%p18) target = $region21
  $region20: #{vgae_enc.4} parent=0 // pred_region
    %21 = vst [vmem:[#allocation2] sm:$0xff] 0.0
    %22 = vst [vmem:[#allocation2 + $0x8] sm:$0xff] 0.0
    %23 = vst [vmem:[#allocation2 + $0x10] sm:$0xff] 0.0
    %24 = vst [vmem:[#allocation2 + $0x18] sm:$0xff] 0.0
    %25 = vst [vmem:[#allocation2 + $0x20] sm:$0xff] 0.0
    %26 = vst [vmem:[#allocation2 + $0x28] sm:$0xff] 0.0
    %27 = vst [vmem:[#allocation2 + $0x30] sm:$0xff] 0.0
    %28 = vst [vmem:[#allocation2 + $0x38] sm:$0xff] 0.0
    %29 = vst [vmem:[#allocation2 + $0x40] sm:$0xff] 0.0
    %30 = vst [vmem:[#allocation2 + $0x48] sm:$0xff] 0.0
    %31 = vst [vmem:[#allocation2 + $0x50] sm:$0xff] 0.0
    %32 = vst [vmem:[#allocation2 + $0x58] sm:$0xff] 0.0
    %33 = vst [vmem:[#allocation2 + $0x60] sm:$0xff] 0.0
    %34 = vst [vmem:[#allocation2 + $0x68] sm:$0xff] 0.0
    %35 = vst [vmem:[#allocation2 + $0x70] sm:$0xff] 0.0
    %36 = vst [vmem:[#allocation2 + $0x78] sm:$0xff] 0.0
  $region21: #{vgae_enc.4} parent=0 // pred_fallthru
    _
  %s37 = smul.u32 0, 128
  %s38 = sshra.s32 %s37, 3
  %s39 = sand.u32 %s37, 7
  %s40 = smul.addr %s38, 4
  %s41 = scalar_lea.vmem %s1, %s40
  %v42 = vld [vmem:[%s41] sm:$0xf]
  %v43 = vld [vmem:[%s41 + $0x4] sm:$0xf]
  %v44 = vld [vmem:[%s41 + $0x8] sm:$0xf]
  %v45 = vld [vmem:[%s41 + $0xc] sm:$0xf]
  %v46 = vld [vmem:[%s41 + $0x10] sm:$0xf]
  %v47 = vld [vmem:[%s41 + $0x14] sm:$0xf]
  %v48 = vld [vmem:[%s41 + $0x18] sm:$0xf]
  %v49 = vld [vmem:[%s41 + $0x1c] sm:$0xf]
  %v50 = vld [vmem:[%s41 + $0x20] sm:$0xf]
  %v51 = vld [vmem:[%s41 + $0x24] sm:$0xf]
  %v52 = vld [vmem:[%s41 + $0x28] sm:$0xf]
  %v53 = vld [vmem:[%s41 + $0x2c] sm:$0xf]
  %v54 = vld [vmem:[%s41 + $0x30] sm:$0xf]
  %v55 = vld [vmem:[%s41 + $0x34] sm:$0xf]
  %v56 = vld [vmem:[%s41 + $0x38] sm:$0xf]
  %v57 = vld [vmem:[%s41 + $0x3c] sm:$0xf]
  %v58 = vld [vmem:[#allocation2] sm:$0xff]
  %v59 = vld [vmem:[#allocation2 + $0x8] sm:$0xff]
  %v60 = vld [vmem:[#allocation2 + $0x10] sm:$0xff]
  %v61 = vld [vmem:[#allocation2 + $0x18] sm:$0xff]
  %v62 = vld [vmem:[#allocation2 + $0x20] sm:$0xff]
  %v63 = vld [vmem:[#allocation2 + $0x28] sm:$0xff]
  %v64 = vld [vmem:[#allocation2 + $0x30] sm:$0xff]
  %v65 = vld [vmem:[#allocation2 + $0x38] sm:$0xff]
  %v66 = vld [vmem:[#allocation2 + $0x40] sm:$0xff]
  %v67 = vld [vmem:[#allocation2 + $0x48] sm:$0xff]
  %v68 = vld [vmem:[#allocation2 + $0x50] sm:$0xff]
  %v69 = vld [vmem:[#allocation2 + $0x58] sm:$0xff]
  %v70 = vld [vmem:[#allocation2 + $0x60] sm:$0xff]
  %v71 = vld [vmem:[#allocation2 + $0x68] sm:$0xff]
  %v72 = vld [vmem:[#allocation2 + $0x70] sm:$0xff]
  %v73 = vld [vmem:[#allocation2 + $0x78] sm:$0xff]
  %v74 = vld [vmem:[%s0] sm:$0xf]
  %v75 = vld [vmem:[%s0 + $0x4] sm:$0xf]
  %v76 = vld [vmem:[%s0 + $0x8] sm:$0xf]
  %v77 = vld [vmem:[%s0 + $0xc] sm:$0xf]
  %v78 = vld [vmem:[%s0 + $0x10] sm:$0xf]
  %v79 = vld [vmem:[%s0 + $0x14] sm:$0xf]
  %v80 = vld [vmem:[%s0 + $0x18] sm:$0xf]
  %v81 = vld [vmem:[%s0 + $0x1c] sm:$0xf]
  %v82 = vld [vmem:[%s0 + $0x20] sm:$0xf]
  %v83 = vld [vmem:[%s0 + $0x24] sm:$0xf]
  %v84 = vld [vmem:[%s0 + $0x28] sm:$0xf]
  %v85 = vld [vmem:[%s0 + $0x2c] sm:$0xf]
  %v86 = vld [vmem:[%s0 + $0x30] sm:$0xf]
  %v87 = vld [vmem:[%s0 + $0x34] sm:$0xf]
  %v88 = vld [vmem:[%s0 + $0x38] sm:$0xf]
  %v89 = vld [vmem:[%s0 + $0x3c] sm:$0xf]
  %v106 = vunpack.c.l.b16 %v74
  %v107 = vunpack.c.l.b16 %v75
  %v108 = vunpack.c.l.b16 %v76
  %v109 = vunpack.c.l.b16 %v77
  %v110 = vunpack.c.l.b16 %v78
  %v111 = vunpack.c.l.b16 %v79
  %v112 = vunpack.c.l.b16 %v80
  %v113 = vunpack.c.l.b16 %v81
  %v114 = vunpack.c.l.b16 %v82
  %v115 = vunpack.c.l.b16 %v83
  %v116 = vunpack.c.l.b16 %v84
  %v117 = vunpack.c.l.b16 %v85
  %v118 = vunpack.c.l.b16 %v86
  %v119 = vunpack.c.l.b16 %v87
  %v120 = vunpack.c.l.b16 %v88
  %v121 = vunpack.c.l.b16 %v89
  %v122 = vpack.c.b16 %v107, %v106
  %v123 = vpack.c.b16 %v109, %v108
  %v124 = vpack.c.b16 %v111, %v110
  %v125 = vpack.c.b16 %v113, %v112
  %v126 = vpack.c.b16 %v115, %v114
  %v127 = vpack.c.b16 %v117, %v116
  %v128 = vpack.c.b16 %v119, %v118
  %v129 = vpack.c.b16 %v121, %v120
  %v154 = vunpack.c.l.b16 %v42
  %v155 = vunpack.c.l.b16 %v43
  %v156 = vunpack.c.l.b16 %v44
  %v157 = vunpack.c.l.b16 %v45
  %v158 = vunpack.c.l.b16 %v46
  %v159 = vunpack.c.l.b16 %v47
  %v160 = vunpack.c.l.b16 %v48
  %v161 = vunpack.c.l.b16 %v49
  %v162 = vunpack.c.l.b16 %v50
  %v163 = vunpack.c.l.b16 %v51
  %v164 = vunpack.c.l.b16 %v52
  %v165 = vunpack.c.l.b16 %v53
  %v166 = vunpack.c.l.b16 %v54
  %v167 = vunpack.c.l.b16 %v55
  %v168 = vunpack.c.l.b16 %v56
  %v169 = vunpack.c.l.b16 %v57
  %v170 = vpack.c.b16 %v155, %v154
  %v171 = vpack.c.b16 %v157, %v156
  %v172 = vpack.c.b16 %v159, %v158
  %v173 = vpack.c.b16 %v161, %v160
  %v174 = vpack.c.b16 %v163, %v162
  %v175 = vpack.c.b16 %v165, %v164
  %v176 = vpack.c.b16 %v167, %v166
  %v177 = vpack.c.b16 %v169, %v168
  %186 = vmatpush.bf16.msra.mxu0 %v177
  %187 = vmatpush.bf16.msra.mxu0 %v176
  %188 = vmatpush.bf16.msra.mxu0 %v175
  %189 = vmatpush.bf16.msra.mxu0 %v174
  %190 = vmatpush.bf16.msra.mxu0 %v173
  %191 = vmatpush.bf16.msra.mxu0 %v172
  %192 = vmatpush.bf16.msra.mxu0 %v171
  %193 = vmatpush.bf16.msra.mxu0 %v170
  %194 = vmatmul.bf16.gmra.mxu0 %v122
  %v195 = vpop.f32.mrf.mxu0
  %v196 = vadd.f32 0.0, %v195
  %v197 = vpop.f32.mrf.mxu0
  %v198 = vadd.f32 0.0, %v197
  %199 = vmatmul.bf16.gmra.mxu0 %v123
  %v200 = vpop.f32.mrf.mxu0
  %v201 = vadd.f32 0.0, %v200
  %v202 = vpop.f32.mrf.mxu0
  %v203 = vadd.f32 0.0, %v202
  %204 = vmatmul.bf16.gmra.mxu0 %v124
  %v205 = vpop.f32.mrf.mxu0
  %v206 = vadd.f32 0.0, %v205
  %v207 = vpop.f32.mrf.mxu0
  %v208 = vadd.f32 0.0, %v207
  %209 = vmatmul.bf16.gmra.mxu0 %v125
  %v210 = vpop.f32.mrf.mxu0
  %v211 = vadd.f32 0.0, %v210
  %v212 = vpop.f32.mrf.mxu0
  %v213 = vadd.f32 0.0, %v212
  %214 = vmatmul.bf16.gmra.mxu0 %v126
  %v215 = vpop.f32.mrf.mxu0
  %v216 = vadd.f32 0.0, %v215
  %v217 = vpop.f32.mrf.mxu0
  %v218 = vadd.f32 0.0, %v217
  %219 = vmatmul.bf16.gmra.mxu0 %v127
  %v220 = vpop.f32.mrf.mxu0
  %v221 = vadd.f32 0.0, %v220
  %v222 = vpop.f32.mrf.mxu0
  %v223 = vadd.f32 0.0, %v222
  %224 = vmatmul.bf16.gmra.mxu0 %v128
  %v225 = vpop.f32.mrf.mxu0
  %v226 = vadd.f32 0.0, %v225
  %v227 = vpop.f32.mrf.mxu0
  %v228 = vadd.f32 0.0, %v227
  %229 = vmatmul.bf16.gmra.mxu0 %v129
  %v230 = vpop.f32.mrf.mxu0
  %v231 = vadd.f32 0.0, %v230
  %v232 = vpop.f32.mrf.mxu0
  %v233 = vadd.f32 0.0, %v232
  %234 = vdwg.mxu0
  %v235 = vadd.f32 %v58, %v196
  %v236 = vadd.f32 %v59, %v198
  %v237 = vadd.f32 %v60, %v201
  %v238 = vadd.f32 %v61, %v203
  %v239 = vadd.f32 %v62, %v206
  %v240 = vadd.f32 %v63, %v208
  %v241 = vadd.f32 %v64, %v211
  %v242 = vadd.f32 %v65, %v213
  %v243 = vadd.f32 %v66, %v216
  %v244 = vadd.f32 %v67, %v218
  %v245 = vadd.f32 %v68, %v221
  %v246 = vadd.f32 %v69, %v223
  %v247 = vadd.f32 %v70, %v226
  %v248 = vadd.f32 %v71, %v228
  %v249 = vadd.f32 %v72, %v231
  %v250 = vadd.f32 %v73, %v233
  %251 = vst [vmem:[#allocation2] sm:$0xff] %v235
  %252 = vst [vmem:[#allocation2 + $0x8] sm:$0xff] %v236
  %253 = vst [vmem:[#allocation2 + $0x10] sm:$0xff] %v237
  %254 = vst [vmem:[#allocation2 + $0x18] sm:$0xff] %v238
  %255 = vst [vmem:[#allocation2 + $0x20] sm:$0xff] %v239
  %256 = vst [vmem:[#allocation2 + $0x28] sm:$0xff] %v240
  %257 = vst [vmem:[#allocation2 + $0x30] sm:$0xff] %v241
  %258 = vst [vmem:[#allocation2 + $0x38] sm:$0xff] %v242
  %259 = vst [vmem:[#allocation2 + $0x40] sm:$0xff] %v243
  %260 = vst [vmem:[#allocation2 + $0x48] sm:$0xff] %v244
  %261 = vst [vmem:[#allocation2 + $0x50] sm:$0xff] %v245
  %262 = vst [vmem:[#allocation2 + $0x58] sm:$0xff] %v246
  %263 = vst [vmem:[#allocation2 + $0x60] sm:$0xff] %v247
  %264 = vst [vmem:[#allocation2 + $0x68] sm:$0xff] %v248
  %265 = vst [vmem:[#allocation2 + $0x70] sm:$0xff] %v249
  %266 = vst [vmem:[#allocation2 + $0x78] sm:$0xff] %v250
  // Predicated region
  $region22: #{vgae_enc.4} parent=0 // pred_check
    %p267 = pneg %p17
  $region23: #{vgae_enc.4} parent=0 // pred_check_branch
    %269 = sbr.rel (%p267) target = $region25
  $region24: #{vgae_enc.4} parent=0 // pred_region
    %v270 = vld [vmem:[#allocation2] sm:$0xff]
    %v271 = vld [vmem:[#allocation2 + $0x8] sm:$0xff]
    %v272 = vld [vmem:[#allocation2 + $0x10] sm:$0xff]
    %v273 = vld [vmem:[#allocation2 + $0x18] sm:$0xff]
    %v274 = vld [vmem:[#allocation2 + $0x20] sm:$0xff]
    %v275 = vld [vmem:[#allocation2 + $0x28] sm:$0xff]
    %v276 = vld [vmem:[#allocation2 + $0x30] sm:$0xff]
    %v277 = vld [vmem:[#allocation2 + $0x38] sm:$0xff]
    %v278 = vld [vmem:[#allocation2 + $0x40] sm:$0xff]
    %v279 = vld [vmem:[#allocation2 + $0x48] sm:$0xff]
    %v280 = vld [vmem:[#allocation2 + $0x50] sm:$0xff]
    %v281 = vld [vmem:[#allocation2 + $0x58] sm:$0xff]
    %v282 = vld [vmem:[#allocation2 + $0x60] sm:$0xff]
    %v283 = vld [vmem:[#allocation2 + $0x68] sm:$0xff]
    %v284 = vld [vmem:[#allocation2 + $0x70] sm:$0xff]
    %v285 = vld [vmem:[#allocation2 + $0x78] sm:$0xff]
    %v286 = vld [vmem:[%s2] sm:$0x1]
    %v288 = vperm.slane %v286, 0
    %v290 = vadd.f32 %v270, %v288
    %v291 = vadd.f32 %v271, %v288
    %v292 = vadd.f32 %v272, %v288
    %v293 = vadd.f32 %v273, %v288
    %v294 = vadd.f32 %v274, %v288
    %v295 = vadd.f32 %v275, %v288
    %v296 = vadd.f32 %v276, %v288
    %v297 = vadd.f32 %v277, %v288
    %v298 = vadd.f32 %v278, %v288
    %v299 = vadd.f32 %v279, %v288
    %v300 = vadd.f32 %v280, %v288
    %v301 = vadd.f32 %v281, %v288
    %v302 = vadd.f32 %v282, %v288
    %v303 = vadd.f32 %v283, %v288
    %v304 = vadd.f32 %v284, %v288
    %v305 = vadd.f32 %v285, %v288
    %v306 = vmax.f32 %v290, 0.0
    %v307 = vmax.f32 %v291, 0.0
    %v308 = vmax.f32 %v292, 0.0
    %v309 = vmax.f32 %v293, 0.0
    %v310 = vmax.f32 %v294, 0.0
    %v311 = vmax.f32 %v295, 0.0
    %v312 = vmax.f32 %v296, 0.0
    %v313 = vmax.f32 %v297, 0.0
    %v314 = vmax.f32 %v298, 0.0
    %v315 = vmax.f32 %v299, 0.0
    %v316 = vmax.f32 %v300, 0.0
    %v317 = vmax.f32 %v301, 0.0
    %v318 = vmax.f32 %v302, 0.0
    %v319 = vmax.f32 %v303, 0.0
    %v320 = vmax.f32 %v304, 0.0
    %v321 = vmax.f32 %v305, 0.0
    %v322 = vpack.c.bf16 %v307, %v306
    %v323 = vpack.c.bf16 %v309, %v308
    %v324 = vpack.c.bf16 %v311, %v310
    %v325 = vpack.c.bf16 %v313, %v312
    %v326 = vpack.c.bf16 %v315, %v314
    %v327 = vpack.c.bf16 %v317, %v316
    %v328 = vpack.c.bf16 %v319, %v318
    %v329 = vpack.c.bf16 %v321, %v320
    %v330 = vld [vmem:[%s3] sm:$0xf]
    %v331 = vld [vmem:[%s3 + $0x4] sm:$0xf]
    %v332 = vld [vmem:[%s3 + $0x8] sm:$0xf]
    %v333 = vld [vmem:[%s3 + $0xc] sm:$0xf]
    %v334 = vld [vmem:[%s3 + $0x10] sm:$0xf]
    %v335 = vld [vmem:[%s3 + $0x14] sm:$0xf]
    %v336 = vld [vmem:[%s3 + $0x18] sm:$0xf]
    %v337 = vld [vmem:[%s3 + $0x1c] sm:$0xf]
    %v338 = vld [vmem:[%s3 + $0x20] sm:$0xf]
    %v339 = vld [vmem:[%s3 + $0x24] sm:$0xf]
    %v340 = vld [vmem:[%s3 + $0x28] sm:$0xf]
    %v341 = vld [vmem:[%s3 + $0x2c] sm:$0xf]
    %v342 = vld [vmem:[%s3 + $0x30] sm:$0xf]
    %v343 = vld [vmem:[%s3 + $0x34] sm:$0xf]
    %v344 = vld [vmem:[%s3 + $0x38] sm:$0xf]
    %v345 = vld [vmem:[%s3 + $0x3c] sm:$0xf]
    %v362 = vunpack.c.l.b16 %v330
    %v363 = vunpack.c.l.b16 %v331
    %v364 = vunpack.c.l.b16 %v332
    %v365 = vunpack.c.l.b16 %v333
    %v366 = vunpack.c.l.b16 %v334
    %v367 = vunpack.c.l.b16 %v335
    %v368 = vunpack.c.l.b16 %v336
    %v369 = vunpack.c.l.b16 %v337
    %v370 = vunpack.c.l.b16 %v338
    %v371 = vunpack.c.l.b16 %v339
    %v372 = vunpack.c.l.b16 %v340
    %v373 = vunpack.c.l.b16 %v341
    %v374 = vunpack.c.l.b16 %v342
    %v375 = vunpack.c.l.b16 %v343
    %v376 = vunpack.c.l.b16 %v344
    %v377 = vunpack.c.l.b16 %v345
    %v378 = vpack.c.b16 %v363, %v362
    %v379 = vpack.c.b16 %v365, %v364
    %v380 = vpack.c.b16 %v367, %v366
    %v381 = vpack.c.b16 %v369, %v368
    %v382 = vpack.c.b16 %v371, %v370
    %v383 = vpack.c.b16 %v373, %v372
    %v384 = vpack.c.b16 %v375, %v374
    %v385 = vpack.c.b16 %v377, %v376
    %394 = vmatpush.bf16.msra.mxu0 %v385
    %395 = vmatpush.bf16.msra.mxu0 %v384
    %396 = vmatpush.bf16.msra.mxu0 %v383
    %397 = vmatpush.bf16.msra.mxu0 %v382
    %398 = vmatpush.bf16.msra.mxu0 %v381
    %399 = vmatpush.bf16.msra.mxu0 %v380
    %400 = vmatpush.bf16.msra.mxu0 %v379
    %401 = vmatpush.bf16.msra.mxu0 %v378
    %402 = vmatmul.bf16.gmra.mxu0 %v322
    %v403 = vpop.f32.mrf.mxu0
    %v404 = vadd.f32 0.0, %v403
    %v405 = vpop.f32.mrf.mxu0
    %v406 = vadd.f32 0.0, %v405
    %407 = vmatmul.bf16.gmra.mxu0 %v323
    %v408 = vpop.f32.mrf.mxu0
    %v409 = vadd.f32 0.0, %v408
    %v410 = vpop.f32.mrf.mxu0
    %v411 = vadd.f32 0.0, %v410
    %412 = vmatmul.bf16.gmra.mxu0 %v324
    %v413 = vpop.f32.mrf.mxu0
    %v414 = vadd.f32 0.0, %v413
    %v415 = vpop.f32.mrf.mxu0
    %v416 = vadd.f32 0.0, %v415
    %417 = vmatmul.bf16.gmra.mxu0 %v325
    %v418 = vpop.f32.mrf.mxu0
    %v419 = vadd.f32 0.0, %v418
    %v420 = vpop.f32.mrf.mxu0
    %v421 = vadd.f32 0.0, %v420
    %422 = vmatmul.bf16.gmra.mxu0 %v326
    %v423 = vpop.f32.mrf.mxu0
    %v424 = vadd.f32 0.0, %v423
    %v425 = vpop.f32.mrf.mxu0
    %v426 = vadd.f32 0.0, %v425
    %427 = vmatmul.bf16.gmra.mxu0 %v327
    %v428 = vpop.f32.mrf.mxu0
    %v429 = vadd.f32 0.0, %v428
    %v430 = vpop.f32.mrf.mxu0
    %v431 = vadd.f32 0.0, %v430
    %432 = vmatmul.bf16.gmra.mxu0 %v328
    %v433 = vpop.f32.mrf.mxu0
    %v434 = vadd.f32 0.0, %v433
    %v435 = vpop.f32.mrf.mxu0
    %v436 = vadd.f32 0.0, %v435
    %437 = vmatmul.bf16.gmra.mxu0 %v329
    %v438 = vpop.f32.mrf.mxu0
    %v439 = vadd.f32 0.0, %v438
    %v440 = vpop.f32.mrf.mxu0
    %v441 = vadd.f32 0.0, %v440
    %442 = vdwg.mxu0
    %v443 = vpack.c.bf16 %v404, %v404
    %v444 = vpack.c.bf16 %v406, %v406
    %v445 = vpack.c.bf16 %v409, %v409
    %v446 = vpack.c.bf16 %v411, %v411
    %v447 = vpack.c.bf16 %v414, %v414
    %v448 = vpack.c.bf16 %v416, %v416
    %v449 = vpack.c.bf16 %v419, %v419
    %v450 = vpack.c.bf16 %v421, %v421
    %v451 = vpack.c.bf16 %v424, %v424
    %v452 = vpack.c.bf16 %v426, %v426
    %v453 = vpack.c.bf16 %v429, %v429
    %v454 = vpack.c.bf16 %v431, %v431
    %v455 = vpack.c.bf16 %v434, %v434
    %v456 = vpack.c.bf16 %v436, %v436
    %v457 = vpack.c.bf16 %v439, %v439
    %v458 = vpack.c.bf16 %v441, %v441
    %459 = vst [vmem:[%s4] sm:$0xf] %v443
    %460 = vst [vmem:[%s4 + $0x4] sm:$0xf] %v444
    %461 = vst [vmem:[%s4 + $0x8] sm:$0xf] %v445
    %462 = vst [vmem:[%s4 + $0xc] sm:$0xf] %v446
    %463 = vst [vmem:[%s4 + $0x10] sm:$0xf] %v447
    %464 = vst [vmem:[%s4 + $0x14] sm:$0xf] %v448
    %465 = vst [vmem:[%s4 + $0x18] sm:$0xf] %v449
    %466 = vst [vmem:[%s4 + $0x1c] sm:$0xf] %v450
    %467 = vst [vmem:[%s4 + $0x20] sm:$0xf] %v451
    %468 = vst [vmem:[%s4 + $0x24] sm:$0xf] %v452
    %469 = vst [vmem:[%s4 + $0x28] sm:$0xf] %v453
    %470 = vst [vmem:[%s4 + $0x2c] sm:$0xf] %v454
    %471 = vst [vmem:[%s4 + $0x30] sm:$0xf] %v455
    %472 = vst [vmem:[%s4 + $0x34] sm:$0xf] %v456
    %473 = vst [vmem:[%s4 + $0x38] sm:$0xf] %v457
    %474 = vst [vmem:[%s4 + $0x3c] sm:$0xf] %v458
  $region25: #{vgae_enc.4} parent=0 // pred_fallthru
    _
  // Predicated region
  $region26: #{vgae_enc.4} parent=0 // pred_check
    _
  $region27: #{vgae_enc.4} parent=0 // pred_check_branch
    %476 = sbr.rel (0) target = $region29
  $region28: #{vgae_enc.4} parent=0 // pred_region
    _
  $region29: #{vgae_enc.4} parent=0 // pred_fallthru
    _
  // Predicated region
  $region30: #{vgae_enc.4} parent=0 // pred_check
    _
  $region31: #{vgae_enc.4} parent=0 // pred_check_branch
    %478 = sbr.rel (0) target = $region33
  $region32: #{vgae_enc.4} parent=0 // pred_region
    _
  $region33: #{vgae_enc.4} parent=0 // pred_fallthru
    _

// kernel: vgae_enc.5
$region0: #{vgae_enc.5}
  #allocation0 [shape = 'u32[]', space=smem, size = 0x4, offset = 0x4, fixed_abs, tag = 'smem constant byte address 0x4 - core index']
  #allocation1 [shape = 'u32[72,128]{1,0:T(1,128)}', space=vmem, size = 0x9000, scoped, tag = 'internal scratch']
  #allocation2 [shape = 'f32[128,128]{1,0:T(8,128)}', space=vmem, size = 0x10000, scoped, tag = 'scratch operand']
  %s0 = inlined_call_operand.vmem [shape: bf16[128,128], index: 0, kind: input, shape index: {}]
  %s1 = inlined_call_operand.vmem [shape: bf16[128,128], index: 1, kind: input, shape index: {}]
  %s2 = inlined_call_operand.vmem [shape: f32[1,128], index: 2, kind: input, shape index: {}]
  %s3 = inlined_call_operand.vmem [shape: f32[128,128], index: 3, kind: output, shape index: {}]
  %s4 = sld [smem:[#allocation0]]
  $region30: #{vgae_enc.5} parent=0
    _
  %s6 = ssub.s32 1, %s4
  %s7 = scalar_select 0, %s6, %s4
  // Predicated region
  $region2: #{vgae_enc.5} parent=0 // pred_check
    _
  $region3: #{vgae_enc.5} parent=0 // pred_check_branch
    %9 = sbr.rel (0) target = $region5
  $region4: #{vgae_enc.5} parent=0 // pred_region
    _
  $region5: #{vgae_enc.5} parent=0 // pred_fallthru
    _
  // Predicated region
  $region6: #{vgae_enc.5} parent=0 // pred_check
    _
  $region7: #{vgae_enc.5} parent=0 // pred_check_branch
    %11 = sbr.rel (0) target = $region9
  $region8: #{vgae_enc.5} parent=0 // pred_region
    _
  $region9: #{vgae_enc.5} parent=0 // pred_fallthru
    _
  // Predicated region
  $region10: #{vgae_enc.5} parent=0 // pred_check
    _
  $region11: #{vgae_enc.5} parent=0 // pred_check_branch
    %13 = sbr.rel (0) target = $region13
  $region12: #{vgae_enc.5} parent=0 // pred_region
    _
  $region13: #{vgae_enc.5} parent=0 // pred_fallthru
    _
  %p14 = scmp.eq.s32.totalorder 0, 0
  // Predicated region
  $region14: #{vgae_enc.5} parent=0 // pred_check
    %p15 = pneg %p14
  $region15: #{vgae_enc.5} parent=0 // pred_check_branch
    %17 = sbr.rel (%p15) target = $region17
  $region16: #{vgae_enc.5} parent=0 // pred_region
    %18 = vst [vmem:[#allocation2] sm:$0xff] 0.0
    %19 = vst [vmem:[#allocation2 + $0x8] sm:$0xff] 0.0
    %20 = vst [vmem:[#allocation2 + $0x10] sm:$0xff] 0.0
    %21 = vst [vmem:[#allocation2 + $0x18] sm:$0xff] 0.0
    %22 = vst [vmem:[#allocation2 + $0x20] sm:$0xff] 0.0
    %23 = vst [vmem:[#allocation2 + $0x28] sm:$0xff] 0.0
    %24 = vst [vmem:[#allocation2 + $0x30] sm:$0xff] 0.0
    %25 = vst [vmem:[#allocation2 + $0x38] sm:$0xff] 0.0
    %26 = vst [vmem:[#allocation2 + $0x40] sm:$0xff] 0.0
    %27 = vst [vmem:[#allocation2 + $0x48] sm:$0xff] 0.0
    %28 = vst [vmem:[#allocation2 + $0x50] sm:$0xff] 0.0
    %29 = vst [vmem:[#allocation2 + $0x58] sm:$0xff] 0.0
    %30 = vst [vmem:[#allocation2 + $0x60] sm:$0xff] 0.0
    %31 = vst [vmem:[#allocation2 + $0x68] sm:$0xff] 0.0
    %32 = vst [vmem:[#allocation2 + $0x70] sm:$0xff] 0.0
    %33 = vst [vmem:[#allocation2 + $0x78] sm:$0xff] 0.0
  $region17: #{vgae_enc.5} parent=0 // pred_fallthru
    _
  %s34 = smul.u32 0, 128
  %s35 = sshra.s32 %s34, 3
  %s36 = sand.u32 %s34, 7
  %s37 = smul.addr %s35, 4
  %s38 = scalar_lea.vmem %s1, %s37
  %v39 = vld [vmem:[%s38] sm:$0xf]
  %v40 = vld [vmem:[%s38 + $0x4] sm:$0xf]
  %v41 = vld [vmem:[%s38 + $0x8] sm:$0xf]
  %v42 = vld [vmem:[%s38 + $0xc] sm:$0xf]
  %v43 = vld [vmem:[%s38 + $0x10] sm:$0xf]
  %v44 = vld [vmem:[%s38 + $0x14] sm:$0xf]
  %v45 = vld [vmem:[%s38 + $0x18] sm:$0xf]
  %v46 = vld [vmem:[%s38 + $0x1c] sm:$0xf]
  %v47 = vld [vmem:[%s38 + $0x20] sm:$0xf]
  %v48 = vld [vmem:[%s38 + $0x24] sm:$0xf]
  %v49 = vld [vmem:[%s38 + $0x28] sm:$0xf]
  %v50 = vld [vmem:[%s38 + $0x2c] sm:$0xf]
  %v51 = vld [vmem:[%s38 + $0x30] sm:$0xf]
  %v52 = vld [vmem:[%s38 + $0x34] sm:$0xf]
  %v53 = vld [vmem:[%s38 + $0x38] sm:$0xf]
  %v54 = vld [vmem:[%s38 + $0x3c] sm:$0xf]
  %v55 = vld [vmem:[#allocation2] sm:$0xff]
  %v56 = vld [vmem:[#allocation2 + $0x8] sm:$0xff]
  %v57 = vld [vmem:[#allocation2 + $0x10] sm:$0xff]
  %v58 = vld [vmem:[#allocation2 + $0x18] sm:$0xff]
  %v59 = vld [vmem:[#allocation2 + $0x20] sm:$0xff]
  %v60 = vld [vmem:[#allocation2 + $0x28] sm:$0xff]
  %v61 = vld [vmem:[#allocation2 + $0x30] sm:$0xff]
  %v62 = vld [vmem:[#allocation2 + $0x38] sm:$0xff]
  %v63 = vld [vmem:[#allocation2 + $0x40] sm:$0xff]
  %v64 = vld [vmem:[#allocation2 + $0x48] sm:$0xff]
  %v65 = vld [vmem:[#allocation2 + $0x50] sm:$0xff]
  %v66 = vld [vmem:[#allocation2 + $0x58] sm:$0xff]
  %v67 = vld [vmem:[#allocation2 + $0x60] sm:$0xff]
  %v68 = vld [vmem:[#allocation2 + $0x68] sm:$0xff]
  %v69 = vld [vmem:[#allocation2 + $0x70] sm:$0xff]
  %v70 = vld [vmem:[#allocation2 + $0x78] sm:$0xff]
  %v71 = vld [vmem:[%s0] sm:$0xf]
  %v72 = vld [vmem:[%s0 + $0x4] sm:$0xf]
  %v73 = vld [vmem:[%s0 + $0x8] sm:$0xf]
  %v74 = vld [vmem:[%s0 + $0xc] sm:$0xf]
  %v75 = vld [vmem:[%s0 + $0x10] sm:$0xf]
  %v76 = vld [vmem:[%s0 + $0x14] sm:$0xf]
  %v77 = vld [vmem:[%s0 + $0x18] sm:$0xf]
  %v78 = vld [vmem:[%s0 + $0x1c] sm:$0xf]
  %v79 = vld [vmem:[%s0 + $0x20] sm:$0xf]
  %v80 = vld [vmem:[%s0 + $0x24] sm:$0xf]
  %v81 = vld [vmem:[%s0 + $0x28] sm:$0xf]
  %v82 = vld [vmem:[%s0 + $0x2c] sm:$0xf]
  %v83 = vld [vmem:[%s0 + $0x30] sm:$0xf]
  %v84 = vld [vmem:[%s0 + $0x34] sm:$0xf]
  %v85 = vld [vmem:[%s0 + $0x38] sm:$0xf]
  %v86 = vld [vmem:[%s0 + $0x3c] sm:$0xf]
  %v103 = vunpack.c.l.b16 %v71
  %v104 = vunpack.c.l.b16 %v72
  %v105 = vunpack.c.l.b16 %v73
  %v106 = vunpack.c.l.b16 %v74
  %v107 = vunpack.c.l.b16 %v75
  %v108 = vunpack.c.l.b16 %v76
  %v109 = vunpack.c.l.b16 %v77
  %v110 = vunpack.c.l.b16 %v78
  %v111 = vunpack.c.l.b16 %v79
  %v112 = vunpack.c.l.b16 %v80
  %v113 = vunpack.c.l.b16 %v81
  %v114 = vunpack.c.l.b16 %v82
  %v115 = vunpack.c.l.b16 %v83
  %v116 = vunpack.c.l.b16 %v84
  %v117 = vunpack.c.l.b16 %v85
  %v118 = vunpack.c.l.b16 %v86
  %v119 = vpack.c.b16 %v104, %v103
  %v120 = vpack.c.b16 %v106, %v105
  %v121 = vpack.c.b16 %v108, %v107
  %v122 = vpack.c.b16 %v110, %v109
  %v123 = vpack.c.b16 %v112, %v111
  %v124 = vpack.c.b16 %v114, %v113
  %v125 = vpack.c.b16 %v116, %v115
  %v126 = vpack.c.b16 %v118, %v117
  %v151 = vunpack.c.l.b16 %v39
  %v152 = vunpack.c.l.b16 %v40
  %v153 = vunpack.c.l.b16 %v41
  %v154 = vunpack.c.l.b16 %v42
  %v155 = vunpack.c.l.b16 %v43
  %v156 = vunpack.c.l.b16 %v44
  %v157 = vunpack.c.l.b16 %v45
  %v158 = vunpack.c.l.b16 %v46
  %v159 = vunpack.c.l.b16 %v47
  %v160 = vunpack.c.l.b16 %v48
  %v161 = vunpack.c.l.b16 %v49
  %v162 = vunpack.c.l.b16 %v50
  %v163 = vunpack.c.l.b16 %v51
  %v164 = vunpack.c.l.b16 %v52
  %v165 = vunpack.c.l.b16 %v53
  %v166 = vunpack.c.l.b16 %v54
  %v167 = vpack.c.b16 %v152, %v151
  %v168 = vpack.c.b16 %v154, %v153
  %v169 = vpack.c.b16 %v156, %v155
  %v170 = vpack.c.b16 %v158, %v157
  %v171 = vpack.c.b16 %v160, %v159
  %v172 = vpack.c.b16 %v162, %v161
  %v173 = vpack.c.b16 %v164, %v163
  %v174 = vpack.c.b16 %v166, %v165
  %183 = vmatpush.bf16.msra.mxu0 %v174
  %184 = vmatpush.bf16.msra.mxu0 %v173
  %185 = vmatpush.bf16.msra.mxu0 %v172
  %186 = vmatpush.bf16.msra.mxu0 %v171
  %187 = vmatpush.bf16.msra.mxu0 %v170
  %188 = vmatpush.bf16.msra.mxu0 %v169
  %189 = vmatpush.bf16.msra.mxu0 %v168
  %190 = vmatpush.bf16.msra.mxu0 %v167
  %191 = vmatmul.bf16.gmra.mxu0 %v119
  %v192 = vpop.f32.mrf.mxu0
  %v193 = vadd.f32 0.0, %v192
  %v194 = vpop.f32.mrf.mxu0
  %v195 = vadd.f32 0.0, %v194
  %196 = vmatmul.bf16.gmra.mxu0 %v120
  %v197 = vpop.f32.mrf.mxu0
  %v198 = vadd.f32 0.0, %v197
  %v199 = vpop.f32.mrf.mxu0
  %v200 = vadd.f32 0.0, %v199
  %201 = vmatmul.bf16.gmra.mxu0 %v121
  %v202 = vpop.f32.mrf.mxu0
  %v203 = vadd.f32 0.0, %v202
  %v204 = vpop.f32.mrf.mxu0
  %v205 = vadd.f32 0.0, %v204
  %206 = vmatmul.bf16.gmra.mxu0 %v122
  %v207 = vpop.f32.mrf.mxu0
  %v208 = vadd.f32 0.0, %v207
  %v209 = vpop.f32.mrf.mxu0
  %v210 = vadd.f32 0.0, %v209
  %211 = vmatmul.bf16.gmra.mxu0 %v123
  %v212 = vpop.f32.mrf.mxu0
  %v213 = vadd.f32 0.0, %v212
  %v214 = vpop.f32.mrf.mxu0
  %v215 = vadd.f32 0.0, %v214
  %216 = vmatmul.bf16.gmra.mxu0 %v124
  %v217 = vpop.f32.mrf.mxu0
  %v218 = vadd.f32 0.0, %v217
  %v219 = vpop.f32.mrf.mxu0
  %v220 = vadd.f32 0.0, %v219
  %221 = vmatmul.bf16.gmra.mxu0 %v125
  %v222 = vpop.f32.mrf.mxu0
  %v223 = vadd.f32 0.0, %v222
  %v224 = vpop.f32.mrf.mxu0
  %v225 = vadd.f32 0.0, %v224
  %226 = vmatmul.bf16.gmra.mxu0 %v126
  %v227 = vpop.f32.mrf.mxu0
  %v228 = vadd.f32 0.0, %v227
  %v229 = vpop.f32.mrf.mxu0
  %v230 = vadd.f32 0.0, %v229
  %231 = vdwg.mxu0
  %v232 = vadd.f32 %v55, %v193
  %v233 = vadd.f32 %v56, %v195
  %v234 = vadd.f32 %v57, %v198
  %v235 = vadd.f32 %v58, %v200
  %v236 = vadd.f32 %v59, %v203
  %v237 = vadd.f32 %v60, %v205
  %v238 = vadd.f32 %v61, %v208
  %v239 = vadd.f32 %v62, %v210
  %v240 = vadd.f32 %v63, %v213
  %v241 = vadd.f32 %v64, %v215
  %v242 = vadd.f32 %v65, %v218
  %v243 = vadd.f32 %v66, %v220
  %v244 = vadd.f32 %v67, %v223
  %v245 = vadd.f32 %v68, %v225
  %v246 = vadd.f32 %v69, %v228
  %v247 = vadd.f32 %v70, %v230
  %248 = vst [vmem:[#allocation2] sm:$0xff] %v232
  %249 = vst [vmem:[#allocation2 + $0x8] sm:$0xff] %v233
  %250 = vst [vmem:[#allocation2 + $0x10] sm:$0xff] %v234
  %251 = vst [vmem:[#allocation2 + $0x18] sm:$0xff] %v235
  %252 = vst [vmem:[#allocation2 + $0x20] sm:$0xff] %v236
  %253 = vst [vmem:[#allocation2 + $0x28] sm:$0xff] %v237
  %254 = vst [vmem:[#allocation2 + $0x30] sm:$0xff] %v238
  %255 = vst [vmem:[#allocation2 + $0x38] sm:$0xff] %v239
  %256 = vst [vmem:[#allocation2 + $0x40] sm:$0xff] %v240
  %257 = vst [vmem:[#allocation2 + $0x48] sm:$0xff] %v241
  %258 = vst [vmem:[#allocation2 + $0x50] sm:$0xff] %v242
  %259 = vst [vmem:[#allocation2 + $0x58] sm:$0xff] %v243
  %260 = vst [vmem:[#allocation2 + $0x60] sm:$0xff] %v244
  %261 = vst [vmem:[#allocation2 + $0x68] sm:$0xff] %v245
  %262 = vst [vmem:[#allocation2 + $0x70] sm:$0xff] %v246
  %263 = vst [vmem:[#allocation2 + $0x78] sm:$0xff] %v247
  // Predicated region
  $region18: #{vgae_enc.5} parent=0 // pred_check
    %p264 = pneg %p14
  $region19: #{vgae_enc.5} parent=0 // pred_check_branch
    %266 = sbr.rel (%p264) target = $region21
  $region20: #{vgae_enc.5} parent=0 // pred_region
    %v267 = vld [vmem:[#allocation2] sm:$0xff]
    %v268 = vld [vmem:[#allocation2 + $0x8] sm:$0xff]
    %v269 = vld [vmem:[#allocation2 + $0x10] sm:$0xff]
    %v270 = vld [vmem:[#allocation2 + $0x18] sm:$0xff]
    %v271 = vld [vmem:[#allocation2 + $0x20] sm:$0xff]
    %v272 = vld [vmem:[#allocation2 + $0x28] sm:$0xff]
    %v273 = vld [vmem:[#allocation2 + $0x30] sm:$0xff]
    %v274 = vld [vmem:[#allocation2 + $0x38] sm:$0xff]
    %v275 = vld [vmem:[#allocation2 + $0x40] sm:$0xff]
    %v276 = vld [vmem:[#allocation2 + $0x48] sm:$0xff]
    %v277 = vld [vmem:[#allocation2 + $0x50] sm:$0xff]
    %v278 = vld [vmem:[#allocation2 + $0x58] sm:$0xff]
    %v279 = vld [vmem:[#allocation2 + $0x60] sm:$0xff]
    %v280 = vld [vmem:[#allocation2 + $0x68] sm:$0xff]
    %v281 = vld [vmem:[#allocation2 + $0x70] sm:$0xff]
    %v282 = vld [vmem:[#allocation2 + $0x78] sm:$0xff]
    %v283 = vld [vmem:[%s2] sm:$0x1]
    %v285 = vperm.slane %v283, 0
    %v287 = vadd.f32 %v267, %v285
    %v288 = vadd.f32 %v268, %v285
    %v289 = vadd.f32 %v269, %v285
    %v290 = vadd.f32 %v270, %v285
    %v291 = vadd.f32 %v271, %v285
    %v292 = vadd.f32 %v272, %v285
    %v293 = vadd.f32 %v273, %v285
    %v294 = vadd.f32 %v274, %v285
    %v295 = vadd.f32 %v275, %v285
    %v296 = vadd.f32 %v276, %v285
    %v297 = vadd.f32 %v277, %v285
    %v298 = vadd.f32 %v278, %v285
    %v299 = vadd.f32 %v279, %v285
    %v300 = vadd.f32 %v280, %v285
    %v301 = vadd.f32 %v281, %v285
    %v302 = vadd.f32 %v282, %v285
    %303 = vst [vmem:[%s3] sm:$0xff] %v287
    %304 = vst [vmem:[%s3 + $0x8] sm:$0xff] %v288
    %305 = vst [vmem:[%s3 + $0x10] sm:$0xff] %v289
    %306 = vst [vmem:[%s3 + $0x18] sm:$0xff] %v290
    %307 = vst [vmem:[%s3 + $0x20] sm:$0xff] %v291
    %308 = vst [vmem:[%s3 + $0x28] sm:$0xff] %v292
    %309 = vst [vmem:[%s3 + $0x30] sm:$0xff] %v293
    %310 = vst [vmem:[%s3 + $0x38] sm:$0xff] %v294
    %311 = vst [vmem:[%s3 + $0x40] sm:$0xff] %v295
    %312 = vst [vmem:[%s3 + $0x48] sm:$0xff] %v296
    %313 = vst [vmem:[%s3 + $0x50] sm:$0xff] %v297
    %314 = vst [vmem:[%s3 + $0x58] sm:$0xff] %v298
    %315 = vst [vmem:[%s3 + $0x60] sm:$0xff] %v299
    %316 = vst [vmem:[%s3 + $0x68] sm:$0xff] %v300
    %317 = vst [vmem:[%s3 + $0x70] sm:$0xff] %v301
    %318 = vst [vmem:[%s3 + $0x78] sm:$0xff] %v302
  $region21: #{vgae_enc.5} parent=0 // pred_fallthru
    _
  // Predicated region
  $region22: #{vgae_enc.5} parent=0 // pred_check
    _
  $region23: #{vgae_enc.5} parent=0 // pred_check_branch
    %320 = sbr.rel (0) target = $region25
  $region24: #{vgae_enc.5} parent=0 // pred_region
    _
  $region25: #{vgae_enc.5} parent=0 // pred_fallthru
    _
  // Predicated region
  $region26: #{vgae_enc.5} parent=0 // pred_check
    _
  $region27: #{vgae_enc.5} parent=0 // pred_check_branch
    %322 = sbr.rel (0) target = $region29
  $region28: #{vgae_enc.5} parent=0 // pred_region
    _
  $region29: #{vgae_enc.5} parent=0 // pred_fallthru
    _

</llo_original>
